<compile_context>
chip_gen: v7x
topology: tpu7x:2x2x1
jax: 0.10.0
libtpu: 0.0.40
codegen_flags: <defaults>
</compile_context>

<pallas_src>
import jax
import jax.numpy as jnp
from jax.experimental import pallas as pl
from jax.experimental.pallas import tpu as pltpu

_LANE = 128      # lane width: every last dim padded to a multiple of this
_M_ALIGN = 16    # sublane alignment that covers bf16 (16) and f32 (8) tiles


def _round_up(n, m):
    return (n + m - 1) // m * m


# Single-buffer request for VMEM-resident blocks (constant index_map -> the
# second pipeline buffer is never refilled, so 1 buffer is enough). Guarded so
# the script still runs if this JAX build rejects buffer_count=1.
try:
    _SINGLE_BUFFER = pl.Buffered(1)
except Exception:  # pragma: no cover - defensive
    _SINGLE_BUFFER = None


def _small_model_kernel(x_ref, w1_ref, b1_ref, w2_ref, b2_ref,
                        logits_ref, hidden_ref):
    # Layer 1: bf16 MXU matmul, f32 accumulate; bias + ReLU on the VPU in f32.
    h = jnp.dot(x_ref[...], w1_ref[...], preferred_element_type=jnp.float32)
    h = jnp.maximum(h + b1_ref[...], 0.0)
    hidden_ref[...] = h.astype(hidden_ref.dtype)

    # Layer 2: bf16 MXU matmul, f32 accumulate; bias in f32; store out_dtype.
    out = jnp.dot(h.astype(w2_ref.dtype), w2_ref[...],
                  preferred_element_type=jnp.float32)
    logits_ref[...] = (out + b2_ref[...]).astype(logits_ref.dtype)


def prepare_small_model_params(w1, b1, w2, b2, *, weight_dtype=jnp.bfloat16):
    """One-time weight prep: pad to lane-dense 128-multiples and cast to bf16.

    Hoisted out of the per-call path so repeated forwards do not re-read and
    re-write every parameter in HBM. Accepts 1-D biases (PyTorch nn.Linear).
    """
    in_dim, hidden_dim = w1.shape
    hd2, out_dim = w2.shape
    assert hd2 == hidden_dim, "w1/w2 hidden dims disagree"
    if b1.ndim == 1:
        b1 = b1[None, :]
    if b2.ndim == 1:
        b2 = b2[None, :]

    k_p = _round_up(in_dim, _LANE)
    h_p = _round_up(hidden_dim, _LANE)
    n_p = _round_up(out_dim, _LANE)

    w1_p = jnp.pad(w1, ((0, k_p - in_dim), (0, h_p - hidden_dim))).astype(weight_dtype)
    w2_p = jnp.pad(w2, ((0, h_p - hidden_dim), (0, n_p - out_dim))).astype(weight_dtype)
    b1_p = jnp.pad(b1.astype(jnp.float32), ((0, 0), (0, h_p - hidden_dim)))
    b2_p = jnp.pad(b2.astype(jnp.float32), ((0, 0), (0, n_p - out_dim)))

    return {
        "w1": w1_p, "b1": b1_p, "w2": w2_p, "b2": b2_p,
        "in_dim": in_dim, "hidden_dim": hidden_dim, "out_dim": out_dim,
    }


def _vmem_estimate_bytes(tile_m, k_p, h_p, n_p, w_itemsize, out_itemsize,
                         weight_bufs):
    weights = (k_p * h_p + h_p * n_p) * w_itemsize * weight_bufs
    biases = (h_p + n_p) * 4 * weight_bufs
    x_bufs = tile_m * k_p * w_itemsize * 2                       # double-buffered
    out_bufs = tile_m * (h_p + n_p) * out_itemsize * 2           # double-buffered
    return weights + biases + x_bufs + out_bufs


def small_model_forward(x, params, *, tile_m=256, out_dtype=jnp.bfloat16):
    """Fused MLP forward. Returns (logits, hidden) like the PyTorch module.

    `params` comes from prepare_small_model_params (padded bf16 weights).
    `tile_m` is clamped to the (16-aligned) batch, so tiny batches do not get
    padded to a full MXU tile.
    """
    batch, in_dim = x.shape
    assert in_dim == params["in_dim"], "x feature dim mismatch"
    w1_p, b1_p, w2_p, b2_p = params["w1"], params["b1"], params["w2"], params["b2"]
    hidden_dim, out_dim = params["hidden_dim"], params["out_dim"]
    k_p, h_p = w1_p.shape
    n_p = w2_p.shape[1]

    # --- batch (M) padding: only to the sublane multiple, not tile_m -------
    tile_m = _round_up(max(tile_m, _M_ALIGN), _M_ALIGN)
    if batch <= tile_m:
        tile_m = _round_up(max(batch, 1), _M_ALIGN)   # e.g. batch=2 -> 16 rows
        m_p = tile_m
    else:
        m_p = _round_up(batch, tile_m)

    # Activation pad (minimal) + bf16 cast. Padded rows are garbage-free zeros
    # on input; their outputs are removed by the final slice.
    x_p = x
    if (m_p, k_p) != (batch, in_dim):
        x_p = jnp.pad(x, ((0, m_p - batch), (0, k_p - in_dim)))
    x_p = x_p.astype(w1_p.dtype)

    grid = (m_p // tile_m,)

    # --- VMEM budget: only raise the scoped limit when actually needed -----
    est = _vmem_estimate_bytes(tile_m, k_p, h_p, n_p,
                               jnp.dtype(w1_p.dtype).itemsize,
                               jnp.dtype(out_dtype).itemsize,
                               weight_bufs=2)          # conservative worst case
    vmem_limit = None
    if est > 12 * 2**20:                                # v5e default headroom
        vmem_limit = min(int(est * 2), 128 * 2**20)

    compiler_params = pltpu.CompilerParams(
        # Batch axis is fully independent -> eligible for TC sharding on v7x.
        dimension_semantics=("parallel",),
        vmem_limit_bytes=vmem_limit,
    )

    def _run(weight_pipeline_mode):
        wkw = {} if weight_pipeline_mode is None else {
            "pipeline_mode": weight_pipeline_mode}
        in_specs = [
            pl.BlockSpec((tile_m, k_p), lambda i: (i, 0)),          # x tile
            pl.BlockSpec((k_p, h_p), lambda i: (0, 0), **wkw),      # w1 resident
            pl.BlockSpec((1, h_p), lambda i: (0, 0), **wkw),        # b1 resident
            pl.BlockSpec((h_p, n_p), lambda i: (0, 0), **wkw),      # w2 resident
            pl.BlockSpec((1, n_p), lambda i: (0, 0), **wkw),        # b2 resident
        ]
        out_specs = (
            pl.BlockSpec((tile_m, n_p), lambda i: (i, 0)),          # logits tile
            pl.BlockSpec((tile_m, h_p), lambda i: (i, 0)),          # hidden tile
        )
        return pl.pallas_call(
            _small_model_kernel,
            out_shape=(
                jax.ShapeDtypeStruct((m_p, n_p), out_dtype),
                jax.ShapeDtypeStruct((m_p, h_p), out_dtype),
            ),
            grid=grid,
            in_specs=in_specs,
            out_specs=out_specs,
            compiler_params=compiler_params,
        )(x_p, w1_p, b1_p, w2_p, b2_p)

    if _SINGLE_BUFFER is not None:
        try:
            logits_p, hidden_p = _run(_SINGLE_BUFFER)
        except Exception:
            # Fallback: default double-buffered resident weights.
            logits_p, hidden_p = _run(None)
    else:
        logits_p, hidden_p = _run(None)

    # Slice padded outputs back to the logical (batch, out) / (batch, hidden).
    return logits_p[:batch, :out_dim], hidden_p[:batch, :hidden_dim]


def _reference_forward(x, w1, b1, w2, b2, out_dtype=jnp.bfloat16):
    # Pure-JAX reference mirroring the kernel's bf16 matmul inputs with f32
    # accumulation and the same output dtype.
    bf = lambda a: a.astype(jnp.bfloat16).astype(jnp.float32)
    b1 = b1.reshape(1, -1).astype(jnp.float32)
    b2 = b2.reshape(1, -1).astype(jnp.float32)
    h = jnp.maximum(bf(x) @ bf(w1) + b1, 0.0)
    logits = bf(h) @ bf(w2) + b2
    return logits.astype(out_dtype), h.astype(out_dtype)


if __name__ == "__main__":
    # Small shapes consistent with a "small model" forward. Batch stays at 2;
    # the kernel pads M only to 16 rows and last dims to 128 lanes internally.
    batch, in_dim, hidden_dim, out_dim = 2, 32, 64, 16

    key = jax.random.PRNGKey(0)
    kx, kw1, kb1, kw2, kb2 = jax.random.split(key, 5)

    x = jax.random.normal(kx, (batch, in_dim), dtype=jnp.float32)
    # Deterministic synthetic parameters (not a checkpoint load). Biases are
    # 1-D, matching PyTorch nn.Linear.
    w1 = jax.random.normal(kw1, (in_dim, hidden_dim), dtype=jnp.float32) * 0.1
    b1 = jax.random.normal(kb1, (hidden_dim,), dtype=jnp.float32) * 0.01
    w2 = jax.random.normal(kw2, (hidden_dim, out_dim), dtype=jnp.float32) * 0.1
    b2 = jax.random.normal(kb2, (out_dim,), dtype=jnp.float32) * 0.01

    # One-time weight prep (pad + bf16 cast hoisted out of the call path).
    params = prepare_small_model_params(w1, b1, w2, b2)

    # Call twice to exercise the cached-weight path; block on results.
    logits, hidden = small_model_forward(x, params)
    logits, hidden = small_model_forward(x, params)
    jax.block_until_ready((logits, hidden))

    # Sanity check against a pure-JAX reference (bf16 outputs -> loose tol).
    ref_logits, ref_hidden = _reference_forward(x, w1, b1, w2, b2)
    assert logits.shape == (batch, out_dim) and hidden.shape == (batch, hidden_dim)
    assert jnp.allclose(logits.astype(jnp.float32), ref_logits.astype(jnp.float32),
                        atol=2e-2, rtol=2e-2)
    assert jnp.allclose(hidden.astype(jnp.float32), ref_hidden.astype(jnp.float32),
                        atol=2e-2, rtol=2e-2)

    print("KERNEL_OK")
</pallas_src>

<mosaic_0001>
module attributes {stable_mosaic.version = 11 : i64} {
  func.func @_small_model_kernel(%arg0: i32, %arg1: memref<16x128xbf16, #tpu.memory_space<vmem>>, %arg2: memref<128x128xbf16, #tpu.memory_space<vmem>>, %arg3: memref<1x128xf32, #tpu.memory_space<vmem>>, %arg4: memref<128x128xbf16, #tpu.memory_space<vmem>>, %arg5: memref<1x128xf32, #tpu.memory_space<vmem>>, %arg6: memref<16x128xbf16, #tpu.memory_space<vmem>>, %arg7: memref<16x128xbf16, #tpu.memory_space<vmem>>) attributes {dimension_semantics = [#tpu.dimension_semantics<parallel>], iteration_bounds = array<i64: 1>, scalar_prefetch = 0 : i64, scratch_operands = 0 : i64, tpu.core_type = #tpu.core_type<tc>, window_params = [{transform_indices = @transform_0, window_bounds = array<i64: 16, 128>}, {pipeline_mode = #tpu.pipeline_mode<synchronous>, transform_indices = @transform_1, window_bounds = array<i64: 128, 128>}, {pipeline_mode = #tpu.pipeline_mode<synchronous>, transform_indices = @transform_2, window_bounds = array<i64: 1, 128>}, {pipeline_mode = #tpu.pipeline_mode<synchronous>, transform_indices = @transform_3, window_bounds = array<i64: 128, 128>}, {pipeline_mode = #tpu.pipeline_mode<synchronous>, transform_indices = @transform_4, window_bounds = array<i64: 1, 128>}, {transform_indices = @transform_5, window_bounds = array<i64: 16, 128>}, {transform_indices = @transform_6, window_bounds = array<i64: 16, 128>}]} {
    %c0 = arith.constant 0 : index
    %c0_0 = arith.constant 0 : index
    %0 = vector.load %arg1[%c0, %c0_0] : memref<16x128xbf16, #tpu.memory_space<vmem>>, vector<16x128xbf16>
    %c0_1 = arith.constant 0 : index
    %c0_2 = arith.constant 0 : index
    %1 = vector.load %arg2[%c0_1, %c0_2] : memref<128x128xbf16, #tpu.memory_space<vmem>>, vector<128x128xbf16>
    %cst = arith.constant dense<0.000000e+00> : vector<16x128xf32>
    %2 = tpu.matmul %0, %1, %cst {dimension_numbers = #tpu.dot_dimension_numbers<[1], [0], [0], [1], [0, 0, 1, 1], [], []>} : vector<16x128xbf16>, vector<128x128xbf16>, vector<16x128xf32> -> vector<16x128xf32>
    %c0_3 = arith.constant 0 : index
    %c0_4 = arith.constant 0 : index
    %3 = vector.load %arg3[%c0_3, %c0_4] : memref<1x128xf32, #tpu.memory_space<vmem>>, vector<1x128xf32>
    %4 = vector.broadcast %3 : vector<1x128xf32> to vector<16x128xf32>
    %5 = arith.addf %2, %4 : vector<16x128xf32>
    %cst_5 = arith.constant 0.000000e+00 : f32
    %6 = vector.broadcast %cst_5 : f32 to vector<16x128xf32>
    %7 = arith.maximumf %5, %6 : vector<16x128xf32>
    %8 = arith.truncf %7 : vector<16x128xf32> to vector<16x128xbf16>
    %c0_6 = arith.constant 0 : index
    %c0_7 = arith.constant 0 : index
    %9 = vector.load %arg7[%c0_6, %c0_7] : memref<16x128xbf16, #tpu.memory_space<vmem>>, vector<16x128xbf16>
    tpu.vector_store %arg7[%c0_6, %c0_7], %8 {strides = array<i32>} : memref<16x128xbf16, #tpu.memory_space<vmem>>, vector<16x128xbf16>,
    %10 = arith.truncf %7 : vector<16x128xf32> to vector<16x128xbf16>
    %c0_8 = arith.constant 0 : index
    %c0_9 = arith.constant 0 : index
    %11 = vector.load %arg4[%c0_8, %c0_9] : memref<128x128xbf16, #tpu.memory_space<vmem>>, vector<128x128xbf16>
    %cst_10 = arith.constant dense<0.000000e+00> : vector<16x128xf32>
    %12 = tpu.matmul %10, %11, %cst_10 {dimension_numbers = #tpu.dot_dimension_numbers<[1], [0], [0], [1], [0, 0, 1, 1], [], []>} : vector<16x128xbf16>, vector<128x128xbf16>, vector<16x128xf32> -> vector<16x128xf32>
    %c0_11 = arith.constant 0 : index
    %c0_12 = arith.constant 0 : index
    %13 = vector.load %arg5[%c0_11, %c0_12] : memref<1x128xf32, #tpu.memory_space<vmem>>, vector<1x128xf32>
    %14 = vector.broadcast %13 : vector<1x128xf32> to vector<16x128xf32>
    %15 = arith.addf %12, %14 : vector<16x128xf32>
    %16 = arith.truncf %15 : vector<16x128xf32> to vector<16x128xbf16>
    %c0_13 = arith.constant 0 : index
    %c0_14 = arith.constant 0 : index
    %17 = vector.load %arg6[%c0_13, %c0_14] : memref<16x128xbf16, #tpu.memory_space<vmem>>, vector<16x128xbf16>
    tpu.vector_store %arg6[%c0_13, %c0_14], %16 {strides = array<i32>} : memref<16x128xbf16, #tpu.memory_space<vmem>>, vector<16x128xbf16>,
    return
  }
  func.func @transform_0(%arg0: i32) -> (i32, i32) {
    %c0_i32 = arith.constant 0 : i32
    %c0_i32_0 = arith.constant 0 : i32
    return %arg0, %c0_i32 : i32, i32
  }
  func.func @transform_1(%arg0: i32) -> (i32, i32) {
    %c0_i32 = arith.constant 0 : i32
    %c0_i32_0 = arith.constant 0 : i32
    %c0_i32_1 = arith.constant 0 : i32
    return %c0_i32, %c0_i32_0 : i32, i32
  }
  func.func @transform_2(%arg0: i32) -> (i32, i32) {
    %c0_i32 = arith.constant 0 : i32
    %c0_i32_0 = arith.constant 0 : i32
    %c0_i32_1 = arith.constant 0 : i32
    return %c0_i32, %c0_i32_0 : i32, i32
  }
  func.func @transform_3(%arg0: i32) -> (i32, i32) {
    %c0_i32 = arith.constant 0 : i32
    %c0_i32_0 = arith.constant 0 : i32
    %c0_i32_1 = arith.constant 0 : i32
    return %c0_i32, %c0_i32_0 : i32, i32
  }
  func.func @transform_4(%arg0: i32) -> (i32, i32) {
    %c0_i32 = arith.constant 0 : i32
    %c0_i32_0 = arith.constant 0 : i32
    %c0_i32_1 = arith.constant 0 : i32
    return %c0_i32, %c0_i32_0 : i32, i32
  }
  func.func @transform_5(%arg0: i32) -> (i32, i32) {
    %c0_i32 = arith.constant 0 : i32
    %c0_i32_0 = arith.constant 0 : i32
    return %arg0, %c0_i32 : i32, i32
  }
  func.func @transform_6(%arg0: i32) -> (i32, i32) {
    %c0_i32 = arith.constant 0 : i32
    %c0_i32_0 = arith.constant 0 : i32
    return %arg0, %c0_i32 : i32, i32
  }
}

module attributes {stable_mosaic.version = 11 : i64} {
  func.func @_small_model_kernel(%arg0: i32, %arg1: memref<16x128xbf16, #tpu.memory_space<vmem>>, %arg2: memref<128x128xbf16, #tpu.memory_space<vmem>>, %arg3: memref<1x128xf32, #tpu.memory_space<vmem>>, %arg4: memref<128x128xbf16, #tpu.memory_space<vmem>>, %arg5: memref<1x128xf32, #tpu.memory_space<vmem>>, %arg6: memref<16x128xbf16, #tpu.memory_space<vmem>>, %arg7: memref<16x128xbf16, #tpu.memory_space<vmem>>) attributes {dimension_semantics = [#tpu.dimension_semantics<parallel>], iteration_bounds = array<i64: 1>, scalar_prefetch = 0 : i64, scratch_operands = 0 : i64, tpu.core_type = #tpu.core_type<tc>, window_params = [{transform_indices = @transform_0, window_bounds = array<i64: 16, 128>}, {pipeline_mode = #tpu.pipeline_mode<synchronous>, transform_indices = @transform_1, window_bounds = array<i64: 128, 128>}, {pipeline_mode = #tpu.pipeline_mode<synchronous>, transform_indices = @transform_2, window_bounds = array<i64: 1, 128>}, {pipeline_mode = #tpu.pipeline_mode<synchronous>, transform_indices = @transform_3, window_bounds = array<i64: 128, 128>}, {pipeline_mode = #tpu.pipeline_mode<synchronous>, transform_indices = @transform_4, window_bounds = array<i64: 1, 128>}, {transform_indices = @transform_5, window_bounds = array<i64: 16, 128>}, {transform_indices = @transform_6, window_bounds = array<i64: 16, 128>}]} {
    %c0 = arith.constant 0 : index
    %c0_0 = arith.constant 0 : index
    %0 = vector.load %arg1[%c0, %c0_0] : memref<16x128xbf16, #tpu.memory_space<vmem>>, vector<16x128xbf16>
    %c0_1 = arith.constant 0 : index
    %c0_2 = arith.constant 0 : index
    %1 = vector.load %arg2[%c0_1, %c0_2] : memref<128x128xbf16, #tpu.memory_space<vmem>>, vector<128x128xbf16>
    %cst = arith.constant dense<0.000000e+00> : vector<16x128xf32>
    %2 = tpu.matmul %0, %1, %cst {dimension_numbers = #tpu.dot_dimension_numbers<[1], [0], [0], [1], [0, 0, 1, 1], [], []>} : vector<16x128xbf16>, vector<128x128xbf16>, vector<16x128xf32> -> vector<16x128xf32>
    %c0_3 = arith.constant 0 : index
    %c0_4 = arith.constant 0 : index
    %3 = vector.load %arg3[%c0_3, %c0_4] : memref<1x128xf32, #tpu.memory_space<vmem>>, vector<1x128xf32>
    %4 = vector.broadcast %3 : vector<1x128xf32> to vector<16x128xf32>
    %5 = arith.addf %2, %4 : vector<16x128xf32>
    %cst_5 = arith.constant 0.000000e+00 : f32
    %6 = vector.broadcast %cst_5 : f32 to vector<16x128xf32>
    %7 = arith.maximumf %5, %6 : vector<16x128xf32>
    %8 = arith.truncf %7 : vector<16x128xf32> to vector<16x128xbf16>
    %c0_6 = arith.constant 0 : index
    %c0_7 = arith.constant 0 : index
    %9 = vector.load %arg7[%c0_6, %c0_7] : memref<16x128xbf16, #tpu.memory_space<vmem>>, vector<16x128xbf16>
    tpu.vector_store %arg7[%c0_6, %c0_7], %8 {strides = array<i32>} : memref<16x128xbf16, #tpu.memory_space<vmem>>, vector<16x128xbf16>,
    %10 = arith.truncf %7 : vector<16x128xf32> to vector<16x128xbf16>
    %c0_8 = arith.constant 0 : index
    %c0_9 = arith.constant 0 : index
    %11 = vector.load %arg4[%c0_8, %c0_9] : memref<128x128xbf16, #tpu.memory_space<vmem>>, vector<128x128xbf16>
    %cst_10 = arith.constant dense<0.000000e+00> : vector<16x128xf32>
    %12 = tpu.matmul %10, %11, %cst_10 {dimension_numbers = #tpu.dot_dimension_numbers<[1], [0], [0], [1], [0, 0, 1, 1], [], []>} : vector<16x128xbf16>, vector<128x128xbf16>, vector<16x128xf32> -> vector<16x128xf32>
    %c0_11 = arith.constant 0 : index
    %c0_12 = arith.constant 0 : index
    %13 = vector.load %arg5[%c0_11, %c0_12] : memref<1x128xf32, #tpu.memory_space<vmem>>, vector<1x128xf32>
    %14 = vector.broadcast %13 : vector<1x128xf32> to vector<16x128xf32>
    %15 = arith.addf %12, %14 : vector<16x128xf32>
    %16 = arith.truncf %15 : vector<16x128xf32> to vector<16x128xbf16>
    %c0_13 = arith.constant 0 : index
    %c0_14 = arith.constant 0 : index
    %17 = vector.load %arg6[%c0_13, %c0_14] : memref<16x128xbf16, #tpu.memory_space<vmem>>, vector<16x128xbf16>
    tpu.vector_store %arg6[%c0_13, %c0_14], %16 {strides = array<i32>} : memref<16x128xbf16, #tpu.memory_space<vmem>>, vector<16x128xbf16>,
    return
  }
  func.func @transform_0(%arg0: i32) -> (i32, i32) {
    %c0_i32 = arith.constant 0 : i32
    %c0_i32_0 = arith.constant 0 : i32
    return %arg0, %c0_i32 : i32, i32
  }
  func.func @transform_1(%arg0: i32) -> (i32, i32) {
    %c0_i32 = arith.constant 0 : i32
    %c0_i32_0 = arith.constant 0 : i32
    %c0_i32_1 = arith.constant 0 : i32
    return %c0_i32, %c0_i32_0 : i32, i32
  }
  func.func @transform_2(%arg0: i32) -> (i32, i32) {
    %c0_i32 = arith.constant 0 : i32
    %c0_i32_0 = arith.constant 0 : i32
    %c0_i32_1 = arith.constant 0 : i32
    return %c0_i32, %c0_i32_0 : i32, i32
  }
  func.func @transform_3(%arg0: i32) -> (i32, i32) {
    %c0_i32 = arith.constant 0 : i32
    %c0_i32_0 = arith.constant 0 : i32
    %c0_i32_1 = arith.constant 0 : i32
    return %c0_i32, %c0_i32_0 : i32, i32
  }
  func.func @transform_4(%arg0: i32) -> (i32, i32) {
    %c0_i32 = arith.constant 0 : i32
    %c0_i32_0 = arith.constant 0 : i32
    %c0_i32_1 = arith.constant 0 : i32
    return %c0_i32, %c0_i32_0 : i32, i32
  }
  func.func @transform_5(%arg0: i32) -> (i32, i32) {
    %c0_i32 = arith.constant 0 : i32
    %c0_i32_0 = arith.constant 0 : i32
    return %arg0, %c0_i32 : i32, i32
  }
  func.func @transform_6(%arg0: i32) -> (i32, i32) {
    %c0_i32 = arith.constant 0 : i32
    %c0_i32_0 = arith.constant 0 : i32
    return %arg0, %c0_i32 : i32, i32
  }
}

</mosaic_0001>

<llo_original>
// kernel: tpu_custom_call.1
$region0: #{tpu_custom_call.1}
  #allocation0 [shape = 'u32[]', space=smem, size = 0x4, offset = 0x4, fixed_abs, tag = 'smem constant byte address 0x4 - core index']
  #allocation1 [shape = 'u32[144,128]{1,0:T(1,128)}', space=vmem, size = 0x12000, scoped, tag = 'internal scratch']
  %s0 = inlined_call_operand.hbm [shape: bf16[16,128], index: 0, kind: input, shape index: {}]
  %s1 = inlined_call_operand.hbm [shape: bf16[128,128], index: 1, kind: input, shape index: {}]
  %s2 = inlined_call_operand.vmem [shape: f32[1,128], index: 2, kind: input, shape index: {}]
  %s3 = inlined_call_operand.hbm [shape: bf16[128,128], index: 3, kind: input, shape index: {}]
  %s4 = inlined_call_operand.vmem [shape: f32[1,128], index: 4, kind: input, shape index: {}]
  %s5 = inlined_call_operand.hbm [shape: bf16[16,128], index: 5, kind: output, shape index: {0}]
  %s6 = inlined_call_operand.hbm [shape: bf16[16,128], index: 6, kind: output, shape index: {1}]
  %7 = xla_tuple %s5, %s6
  %s8 = sld [smem:[#allocation0]]
  $region50: #{tpu_custom_call.1} parent=0
    _
  %s10 = ssub.s32 1, %s8
  %s11 = scalar_select 0, %s10, %s8
  $region1: #{tpu_custom_call.1} parent=0
    #allocation2 [shape = 'u8[4096]{0}', space=vmem, size = 0x1000, scoped, tag = 'input window, operand 0, single buffered']
    #allocation3 [shape = 's32[1]{0}', space=sflag, size = 0x4, scoped, tag = 'scoped memory for tpu_custom_call.1']
    #allocation4 [shape = 's32[1]{0}', space=sflag, size = 0x4, scoped, tag = 'scoped memory for tpu_custom_call.1']
    #allocation5 [shape = 'u8[32768]{0}', space=vmem, size = 0x8000, scoped, tag = 'input window, operand 1, single buffered']
    #allocation6 [shape = 's32[1]{0}', space=sflag, size = 0x4, scoped, tag = 'scoped memory for tpu_custom_call.1']
    #allocation7 [shape = 'u8[32768]{0}', space=vmem, size = 0x8000, scoped, tag = 'input window, operand 3, single buffered']
    #allocation8 [shape = 'u8[4096]{0}', space=vmem, size = 0x1000, scoped, tag = 'output window, operand 0, single buffered']
    #allocation9 [shape = 'u8[4096]{0}', space=vmem, size = 0x1000, scoped, tag = 'output window, operand 1, single buffered']
    #allocation10 [shape = 's32[1]{0}', space=sflag, size = 0x4, scoped, tag = 'scoped memory for tpu_custom_call.1']
    %12 = vsyncpa [#allocation3], 0
    %13 = vsyncpa [#allocation6], 0
    %14 = vsyncpa [#allocation4], 0
    %15 = vsyncpa [#allocation10], 0
    // Predicated region
    $region2: #{tpu_custom_call.1} parent=1 // pred_check
      _
    $region3: #{tpu_custom_call.1} parent=1 // pred_check_branch
      %17 = sbr.rel (0) target = $region5
    $region4: #{tpu_custom_call.1} parent=1 // pred_region
      %s19 = ssub.s32 128, 128
      %20 = vsyncadd [#allocation3], %s19
      %s21 = sshll.u32 [#allocation2], 4
      %s22 = int_to_ptr.vmem [resolvable:$true] %s21
      %27 = dma.hbm_to_vmem [thread:$0]  %s0, 128, %s22, [#allocation3], 64, 64, 4
    $region5: #{tpu_custom_call.1} parent=1 // pred_fallthru
      _
    // Predicated region
    $region6: #{tpu_custom_call.1} parent=1 // pred_check
      _
    $region7: #{tpu_custom_call.1} parent=1 // pred_check_branch
      %29 = sbr.rel (0) target = $region9
    $region8: #{tpu_custom_call.1} parent=1 // pred_region
      %s31 = ssub.s32 1024, 1024
      %32 = vsyncadd [#allocation6], %s31
      %s33 = sshll.u32 [#allocation5], 4
      %s34 = int_to_ptr.vmem [resolvable:$true] %s33
      %39 = dma.hbm_to_vmem [thread:$0]  %s1, 1024, %s34, [#allocation6], 64, 64, 4
    $region9: #{tpu_custom_call.1} parent=1 // pred_fallthru
      _
    // Predicated region
    $region10: #{tpu_custom_call.1} parent=1 // pred_check
      _
    $region11: #{tpu_custom_call.1} parent=1 // pred_check_branch
      %41 = sbr.rel (0) target = $region13
    $region12: #{tpu_custom_call.1} parent=1 // pred_region
      _
    $region13: #{tpu_custom_call.1} parent=1 // pred_fallthru
      _
    // Predicated region
    $region14: #{tpu_custom_call.1} parent=1 // pred_check
      _
    $region15: #{tpu_custom_call.1} parent=1 // pred_check_branch
      %43 = sbr.rel (0) target = $region17
    $region16: #{tpu_custom_call.1} parent=1 // pred_region
      %s45 = ssub.s32 1024, 1024
      %46 = vsyncadd [#allocation6], %s45
      %s47 = sshll.u32 [#allocation7], 4
      %s48 = int_to_ptr.vmem [resolvable:$true] %s47
      %53 = dma.hbm_to_vmem [thread:$0]  %s3, 1024, %s48, [#allocation6], 64, 64, 4
    $region17: #{tpu_custom_call.1} parent=1 // pred_fallthru
      _
    // Predicated region
    $region18: #{tpu_custom_call.1} parent=1 // pred_check
      _
    $region19: #{tpu_custom_call.1} parent=1 // pred_check_branch
      %55 = sbr.rel (0) target = $region21
    $region20: #{tpu_custom_call.1} parent=1 // pred_region
      _
    $region21: #{tpu_custom_call.1} parent=1 // pred_fallthru
      _
    // Predicated region
    $region22: #{tpu_custom_call.1} parent=1 // pred_check
      _
    $region23: #{tpu_custom_call.1} parent=1 // pred_check_branch
      %57 = sbr.rel (0) target = $region25
    $region24: #{tpu_custom_call.1} parent=1 // pred_region
      %58 = dma.done [#allocation3], 128
    $region25: #{tpu_custom_call.1} parent=1 // pred_fallthru
      _
    // Predicated region
    $region26: #{tpu_custom_call.1} parent=1 // pred_check
      _
    $region27: #{tpu_custom_call.1} parent=1 // pred_check_branch
      %60 = sbr.rel (0) target = $region29
    $region28: #{tpu_custom_call.1} parent=1 // pred_region
      %61 = dma.done [#allocation6], 1024
    $region29: #{tpu_custom_call.1} parent=1 // pred_fallthru
      _
    // Predicated region
    $region30: #{tpu_custom_call.1} parent=1 // pred_check
      _
    $region31: #{tpu_custom_call.1} parent=1 // pred_check_branch
      %63 = sbr.rel (0) target = $region33
    $region32: #{tpu_custom_call.1} parent=1 // pred_region
      %64 = dma.done [#allocation6], 1024
    $region33: #{tpu_custom_call.1} parent=1 // pred_fallthru
      _
    %v66 = vld [vmem:[#allocation2] sm:$0xf]
    %v67 = vld [vmem:[#allocation2 + $0x4] sm:$0xf]
    %v68 = vld [vmem:[#allocation5] sm:$0xf]
    %v69 = vld [vmem:[#allocation5 + $0x4] sm:$0xf]
    %v70 = vld [vmem:[#allocation5 + $0x8] sm:$0xf]
    %v71 = vld [vmem:[#allocation5 + $0xc] sm:$0xf]
    %v72 = vld [vmem:[#allocation5 + $0x10] sm:$0xf]
    %v73 = vld [vmem:[#allocation5 + $0x14] sm:$0xf]
    %v74 = vld [vmem:[#allocation5 + $0x18] sm:$0xf]
    %v75 = vld [vmem:[#allocation5 + $0x1c] sm:$0xf]
    %v76 = vld [vmem:[#allocation5 + $0x20] sm:$0xf]
    %v77 = vld [vmem:[#allocation5 + $0x24] sm:$0xf]
    %v78 = vld [vmem:[#allocation5 + $0x28] sm:$0xf]
    %v79 = vld [vmem:[#allocation5 + $0x2c] sm:$0xf]
    %v80 = vld [vmem:[#allocation5 + $0x30] sm:$0xf]
    %v81 = vld [vmem:[#allocation5 + $0x34] sm:$0xf]
    %v82 = vld [vmem:[#allocation5 + $0x38] sm:$0xf]
    %v83 = vld [vmem:[#allocation5 + $0x3c] sm:$0xf]
    %v84 = vld [vmem:[%s2] sm:$0x1]
    %v86 = vlaneseq
    %v87 = vshrl.u32 %v86, 7
    %v88 = vsub.s32 0, %v87
    %v89 = vrot.slane %v84, %v88
    %v93 = vunpack.c.l.b16 %v66
    %v94 = vunpack.c.l.b16 %v67
    %v95 = vpack.c.b16 %v94, %v93
    %v113 = vunpack.c.l.b16 %v68
    %v114 = vunpack.c.l.b16 %v69
    %v115 = vunpack.c.l.b16 %v70
    %v116 = vunpack.c.l.b16 %v71
    %v117 = vunpack.c.l.b16 %v72
    %v118 = vunpack.c.l.b16 %v73
    %v119 = vunpack.c.l.b16 %v74
    %v120 = vunpack.c.l.b16 %v75
    %v121 = vunpack.c.l.b16 %v76
    %v122 = vunpack.c.l.b16 %v77
    %v123 = vunpack.c.l.b16 %v78
    %v124 = vunpack.c.l.b16 %v79
    %v125 = vunpack.c.l.b16 %v80
    %v126 = vunpack.c.l.b16 %v81
    %v127 = vunpack.c.l.b16 %v82
    %v128 = vunpack.c.l.b16 %v83
    %v129 = vpack.c.b16 %v114, %v113
    %v130 = vpack.c.b16 %v116, %v115
    %v131 = vpack.c.b16 %v118, %v117
    %v132 = vpack.c.b16 %v120, %v119
    %v133 = vpack.c.b16 %v122, %v121
    %v134 = vpack.c.b16 %v124, %v123
    %v135 = vpack.c.b16 %v126, %v125
    %v136 = vpack.c.b16 %v128, %v127
    %145 = vmatprep.subr.bf16.mxu0 0
    %146 = vmatpush1.bf16.msra.mxu0 %v129
    %147 = vmatprep.subr.bf16.mxu0 0
    %148 = vmatpush1.bf16.msra.mxu0 %v130
    %149 = vmatprep.subr.bf16.mxu0 0
    %150 = vmatpush1.bf16.msra.mxu0 %v131
    %151 = vmatprep.subr.bf16.mxu0 0
    %152 = vmatpush1.bf16.msra.mxu0 %v132
    %153 = vmatprep.subr.bf16.mxu0 0
    %154 = vmatpush1.bf16.msra.mxu0 %v133
    %155 = vmatprep.subr.bf16.mxu0 0
    %156 = vmatpush1.bf16.msra.mxu0 %v134
    %157 = vmatprep.subr.bf16.mxu0 0
    %158 = vmatpush1.bf16.msra.mxu0 %v135
    %159 = vmatprep.subr.bf16.mxu0 0
    %160 = vmatpush1.bf16.msra.mxu0 %v136
    %161 = vmatprep.subr.bf16.mxu0 0
    %162 = vmatpush1.bf16.msra.mxu0 0
    %163 = vmatprep.subr.bf16.mxu0 0
    %164 = vmatpush1.bf16.msra.mxu0 0
    %165 = vmatprep.subr.bf16.mxu0 0
    %166 = vmatpush1.bf16.msra.mxu0 0
    %167 = vmatprep.subr.bf16.mxu0 0
    %168 = vmatpush1.bf16.msra.mxu0 0
    %169 = vmatprep.subr.bf16.mxu0 0
    %170 = vmatpush1.bf16.msra.mxu0 0
    %171 = vmatprep.subr.bf16.mxu0 0
    %172 = vmatpush1.bf16.msra.mxu0 0
    %173 = vmatprep.subr.bf16.mxu0 0
    %174 = vmatpush1.bf16.msra.mxu0 0
    %175 = vmatprep.subr.bf16.mxu0 0
    %176 = vmatpush1.bf16.msra.mxu0 0
    %177 = vmatprep.mubr.bf16.mxu0 0
    %178 = vmatmul.mubr.bf16.gmra.mrb[0].mxu0 %v95
    %v179 = vpop.f32.mrb[0].mxu0
    %v180 = vadd.f32 %v89, %v179
    %v181 = vpop.f32.mrb[0].mxu0
    %v182 = vpop.f32.mrb[0].mxu0
    %v183 = vadd.f32 %v89, %v182
    %v184 = vpop.f32.mrb[0].mxu0
    %185 = vdwg.mxu0
    %v186 = vmax.f32 %v180, 0.0
    %v187 = vmax.f32 %v183, 0.0
    %v188 = vpack.c.bf16 %v187, %v186
    %v190 = vunpack.c.l.b16 %v188
    %v191 = vunpack.c.h.b16 %v188
    %v192 = vpack.c.b16 %v190, %v190
    %v193 = vpack.c.b16 %v191, %v191
    %196 = vst [vmem:[#allocation9] sm:$0xf] %v192
    %197 = vst [vmem:[#allocation9 + $0x4] sm:$0xf] %v193
    %v198 = vld [vmem:[#allocation7] sm:$0xf]
    %v199 = vld [vmem:[#allocation7 + $0x4] sm:$0xf]
    %v200 = vld [vmem:[#allocation7 + $0x8] sm:$0xf]
    %v201 = vld [vmem:[#allocation7 + $0xc] sm:$0xf]
    %v202 = vld [vmem:[#allocation7 + $0x10] sm:$0xf]
    %v203 = vld [vmem:[#allocation7 + $0x14] sm:$0xf]
    %v204 = vld [vmem:[#allocation7 + $0x18] sm:$0xf]
    %v205 = vld [vmem:[#allocation7 + $0x1c] sm:$0xf]
    %v206 = vld [vmem:[#allocation7 + $0x20] sm:$0xf]
    %v207 = vld [vmem:[#allocation7 + $0x24] sm:$0xf]
    %v208 = vld [vmem:[#allocation7 + $0x28] sm:$0xf]
    %v209 = vld [vmem:[#allocation7 + $0x2c] sm:$0xf]
    %v210 = vld [vmem:[#allocation7 + $0x30] sm:$0xf]
    %v211 = vld [vmem:[#allocation7 + $0x34] sm:$0xf]
    %v212 = vld [vmem:[#allocation7 + $0x38] sm:$0xf]
    %v213 = vld [vmem:[#allocation7 + $0x3c] sm:$0xf]
    %v214 = vld [vmem:[%s4] sm:$0x1]
    %v216 = vlaneseq
    %v217 = vshrl.u32 %v216, 7
    %v218 = vsub.s32 0, %v217
    %v219 = vrot.slane %v214, %v218
    %v237 = vunpack.c.l.b16 %v198
    %v238 = vunpack.c.l.b16 %v199
    %v239 = vunpack.c.l.b16 %v200
    %v240 = vunpack.c.l.b16 %v201
    %v241 = vunpack.c.l.b16 %v202
    %v242 = vunpack.c.l.b16 %v203
    %v243 = vunpack.c.l.b16 %v204
    %v244 = vunpack.c.l.b16 %v205
    %v245 = vunpack.c.l.b16 %v206
    %v246 = vunpack.c.l.b16 %v207
    %v247 = vunpack.c.l.b16 %v208
    %v248 = vunpack.c.l.b16 %v209
    %v249 = vunpack.c.l.b16 %v210
    %v250 = vunpack.c.l.b16 %v211
    %v251 = vunpack.c.l.b16 %v212
    %v252 = vunpack.c.l.b16 %v213
    %v253 = vpack.c.b16 %v238, %v237
    %v254 = vpack.c.b16 %v240, %v239
    %v255 = vpack.c.b16 %v242, %v241
    %v256 = vpack.c.b16 %v244, %v243
    %v257 = vpack.c.b16 %v246, %v245
    %v258 = vpack.c.b16 %v248, %v247
    %v259 = vpack.c.b16 %v250, %v249
    %v260 = vpack.c.b16 %v252, %v251
    %269 = vmatprep.subr.bf16.mxu0 0
    %270 = vmatpush1.bf16.msra.mxu0 %v253
    %271 = vmatprep.subr.bf16.mxu0 0
    %272 = vmatpush1.bf16.msra.mxu0 %v254
    %273 = vmatprep.subr.bf16.mxu0 0
    %274 = vmatpush1.bf16.msra.mxu0 %v255
    %275 = vmatprep.subr.bf16.mxu0 0
    %276 = vmatpush1.bf16.msra.mxu0 %v256
    %277 = vmatprep.subr.bf16.mxu0 0
    %278 = vmatpush1.bf16.msra.mxu0 %v257
    %279 = vmatprep.subr.bf16.mxu0 0
    %280 = vmatpush1.bf16.msra.mxu0 %v258
    %281 = vmatprep.subr.bf16.mxu0 0
    %282 = vmatpush1.bf16.msra.mxu0 %v259
    %283 = vmatprep.subr.bf16.mxu0 0
    %284 = vmatpush1.bf16.msra.mxu0 %v260
    %285 = vmatprep.subr.bf16.mxu0 0
    %286 = vmatpush1.bf16.msra.mxu0 0
    %287 = vmatprep.subr.bf16.mxu0 0
    %288 = vmatpush1.bf16.msra.mxu0 0
    %289 = vmatprep.subr.bf16.mxu0 0
    %290 = vmatpush1.bf16.msra.mxu0 0
    %291 = vmatprep.subr.bf16.mxu0 0
    %292 = vmatpush1.bf16.msra.mxu0 0
    %293 = vmatprep.subr.bf16.mxu0 0
    %294 = vmatpush1.bf16.msra.mxu0 0
    %295 = vmatprep.subr.bf16.mxu0 0
    %296 = vmatpush1.bf16.msra.mxu0 0
    %297 = vmatprep.subr.bf16.mxu0 0
    %298 = vmatpush1.bf16.msra.mxu0 0
    %299 = vmatprep.subr.bf16.mxu0 0
    %300 = vmatpush1.bf16.msra.mxu0 0
    %301 = vmatprep.mubr.bf16.mxu0 0
    %302 = vmatmul.mubr.bf16.gmra.mrb[0].mxu0 %v188
    %v303 = vpop.f32.mrb[0].mxu0
    %v304 = vadd.f32 %v219, %v303
    %v305 = vpop.f32.mrb[0].mxu0
    %v306 = vpop.f32.mrb[0].mxu0
    %v307 = vadd.f32 %v219, %v306
    %v308 = vpop.f32.mrb[0].mxu0
    %309 = vdwg.mxu0
    %v310 = vpack.c.bf16 %v307, %v304
    %v312 = vunpack.c.l.b16 %v310
    %v313 = vunpack.c.h.b16 %v310
    %v314 = vpack.c.b16 %v312, %v312
    %v315 = vpack.c.b16 %v313, %v313
    %318 = vst [vmem:[#allocation8] sm:$0xf] %v314
    %319 = vst [vmem:[#allocation8 + $0x4] sm:$0xf] %v315
    // Predicated region
    $region34: #{tpu_custom_call.1} parent=1 // pred_check
      _
    $region35: #{tpu_custom_call.1} parent=1 // pred_check_branch
      %321 = sbr.rel (0) target = $region37
    $region36: #{tpu_custom_call.1} parent=1 // pred_region
      %s323 = ssub.s32 128, 128
      %324 = vsyncadd [#allocation4], %s323
      %s325 = sshll.u32 [#allocation8], 4
      %s326 = int_to_ptr.vmem [resolvable:$true] %s325
      %331 = dma.vmem_to_hbm [thread:$0]  %s326, 128, %s5, [#allocation4], 64, 64, 4
    $region37: #{tpu_custom_call.1} parent=1 // pred_fallthru
      _
    // Predicated region
    $region38: #{tpu_custom_call.1} parent=1 // pred_check
      _
    $region39: #{tpu_custom_call.1} parent=1 // pred_check_branch
      %333 = sbr.rel (0) target = $region41
    $region40: #{tpu_custom_call.1} parent=1 // pred_region
      %s335 = ssub.s32 128, 128
      %336 = vsyncadd [#allocation10], %s335
      %s337 = sshll.u32 [#allocation9], 4
      %s338 = int_to_ptr.vmem [resolvable:$true] %s337
      %343 = dma.vmem_to_hbm [thread:$0]  %s338, 128, %s6, [#allocation10], 64, 64, 4
    $region41: #{tpu_custom_call.1} parent=1 // pred_fallthru
      _
    // Predicated region
    $region42: #{tpu_custom_call.1} parent=1 // pred_check
      _
    $region43: #{tpu_custom_call.1} parent=1 // pred_check_branch
      %345 = sbr.rel (0) target = $region45
    $region44: #{tpu_custom_call.1} parent=1 // pred_region
      %346 = dma.done [#allocation4], 128
    $region45: #{tpu_custom_call.1} parent=1 // pred_fallthru
      _
    // Predicated region
    $region46: #{tpu_custom_call.1} parent=1 // pred_check
      _
    $region47: #{tpu_custom_call.1} parent=1 // pred_check_branch
      %348 = sbr.rel (0) target = $region49
    $region48: #{tpu_custom_call.1} parent=1 // pred_region
      %349 = dma.done [#allocation10], 128
    $region49: #{tpu_custom_call.1} parent=1 // pred_fallthru
      _
    %350 = vsyncpa [#allocation3], 1
    %351 = vsyncpa [#allocation6], 1
    %352 = vsyncpa [#allocation4], 1
    %353 = vsyncpa [#allocation10], 1

// kernel: tpu_custom_call.1
$region0: #{tpu_custom_call.1}
  #allocation0 [shape = 'u32[]', space=smem, size = 0x4, offset = 0x4, fixed_abs, tag = 'smem constant byte address 0x4 - core index']
  #allocation1 [shape = 'u32[144,128]{1,0:T(1,128)}', space=vmem, size = 0x12000, scoped, tag = 'internal scratch']
  %s0 = inlined_call_operand.hbm [shape: bf16[16,128], index: 0, kind: input, shape index: {}]
  %s1 = inlined_call_operand.hbm [shape: bf16[128,128], index: 1, kind: input, shape index: {}]
  %s2 = inlined_call_operand.vmem [shape: f32[1,128], index: 2, kind: input, shape index: {}]
  %s3 = inlined_call_operand.hbm [shape: bf16[128,128], index: 3, kind: input, shape index: {}]
  %s4 = inlined_call_operand.vmem [shape: f32[1,128], index: 4, kind: input, shape index: {}]
  %s5 = inlined_call_operand.hbm [shape: bf16[16,128], index: 5, kind: output, shape index: {0}]
  %s6 = inlined_call_operand.hbm [shape: bf16[16,128], index: 6, kind: output, shape index: {1}]
  %7 = xla_tuple %s5, %s6
  %s8 = sld [smem:[#allocation0]]
  $region50: #{tpu_custom_call.1} parent=0
    _
  %s10 = ssub.s32 1, %s8
  %s11 = scalar_select 0, %s10, %s8
  $region1: #{tpu_custom_call.1} parent=0
    #allocation2 [shape = 'u8[4096]{0}', space=vmem, size = 0x1000, scoped, tag = 'input window, operand 0, single buffered']
    #allocation3 [shape = 's32[1]{0}', space=sflag, size = 0x4, scoped, tag = 'scoped memory for tpu_custom_call.1']
    #allocation4 [shape = 's32[1]{0}', space=sflag, size = 0x4, scoped, tag = 'scoped memory for tpu_custom_call.1']
    #allocation5 [shape = 'u8[32768]{0}', space=vmem, size = 0x8000, scoped, tag = 'input window, operand 1, single buffered']
    #allocation6 [shape = 's32[1]{0}', space=sflag, size = 0x4, scoped, tag = 'scoped memory for tpu_custom_call.1']
    #allocation7 [shape = 'u8[32768]{0}', space=vmem, size = 0x8000, scoped, tag = 'input window, operand 3, single buffered']
    #allocation8 [shape = 'u8[4096]{0}', space=vmem, size = 0x1000, scoped, tag = 'output window, operand 0, single buffered']
    #allocation9 [shape = 'u8[4096]{0}', space=vmem, size = 0x1000, scoped, tag = 'output window, operand 1, single buffered']
    #allocation10 [shape = 's32[1]{0}', space=sflag, size = 0x4, scoped, tag = 'scoped memory for tpu_custom_call.1']
    %12 = vsyncpa [#allocation3], 0
    %13 = vsyncpa [#allocation6], 0
    %14 = vsyncpa [#allocation4], 0
    %15 = vsyncpa [#allocation10], 0
    // Predicated region
    $region2: #{tpu_custom_call.1} parent=1 // pred_check
      _
    $region3: #{tpu_custom_call.1} parent=1 // pred_check_branch
      %17 = sbr.rel (0) target = $region5
    $region4: #{tpu_custom_call.1} parent=1 // pred_region
      %s19 = ssub.s32 128, 128
      %20 = vsyncadd [#allocation3], %s19
      %s21 = sshll.u32 [#allocation2], 4
      %s22 = int_to_ptr.vmem [resolvable:$true] %s21
      %27 = dma.hbm_to_vmem [thread:$0]  %s0, 128, %s22, [#allocation3], 64, 64, 4
    $region5: #{tpu_custom_call.1} parent=1 // pred_fallthru
      _
    // Predicated region
    $region6: #{tpu_custom_call.1} parent=1 // pred_check
      _
    $region7: #{tpu_custom_call.1} parent=1 // pred_check_branch
      %29 = sbr.rel (0) target = $region9
    $region8: #{tpu_custom_call.1} parent=1 // pred_region
      %s31 = ssub.s32 1024, 1024
      %32 = vsyncadd [#allocation6], %s31
      %s33 = sshll.u32 [#allocation5], 4
      %s34 = int_to_ptr.vmem [resolvable:$true] %s33
      %39 = dma.hbm_to_vmem [thread:$0]  %s1, 1024, %s34, [#allocation6], 64, 64, 4
    $region9: #{tpu_custom_call.1} parent=1 // pred_fallthru
      _
    // Predicated region
    $region10: #{tpu_custom_call.1} parent=1 // pred_check
      _
    $region11: #{tpu_custom_call.1} parent=1 // pred_check_branch
      %41 = sbr.rel (0) target = $region13
    $region12: #{tpu_custom_call.1} parent=1 // pred_region
      _
    $region13: #{tpu_custom_call.1} parent=1 // pred_fallthru
      _
    // Predicated region
    $region14: #{tpu_custom_call.1} parent=1 // pred_check
      _
    $region15: #{tpu_custom_call.1} parent=1 // pred_check_branch
      %43 = sbr.rel (0) target = $region17
    $region16: #{tpu_custom_call.1} parent=1 // pred_region
      %s45 = ssub.s32 1024, 1024
      %46 = vsyncadd [#allocation6], %s45
      %s47 = sshll.u32 [#allocation7], 4
      %s48 = int_to_ptr.vmem [resolvable:$true] %s47
      %53 = dma.hbm_to_vmem [thread:$0]  %s3, 1024, %s48, [#allocation6], 64, 64, 4
    $region17: #{tpu_custom_call.1} parent=1 // pred_fallthru
      _
    // Predicated region
    $region18: #{tpu_custom_call.1} parent=1 // pred_check
      _
    $region19: #{tpu_custom_call.1} parent=1 // pred_check_branch
      %55 = sbr.rel (0) target = $region21
    $region20: #{tpu_custom_call.1} parent=1 // pred_region
      _
    $region21: #{tpu_custom_call.1} parent=1 // pred_fallthru
      _
    // Predicated region
    $region22: #{tpu_custom_call.1} parent=1 // pred_check
      _
    $region23: #{tpu_custom_call.1} parent=1 // pred_check_branch
      %57 = sbr.rel (0) target = $region25
    $region24: #{tpu_custom_call.1} parent=1 // pred_region
      %58 = dma.done [#allocation3], 128
    $region25: #{tpu_custom_call.1} parent=1 // pred_fallthru
      _
    // Predicated region
    $region26: #{tpu_custom_call.1} parent=1 // pred_check
      _
    $region27: #{tpu_custom_call.1} parent=1 // pred_check_branch
      %60 = sbr.rel (0) target = $region29
    $region28: #{tpu_custom_call.1} parent=1 // pred_region
      %61 = dma.done [#allocation6], 1024
    $region29: #{tpu_custom_call.1} parent=1 // pred_fallthru
      _
    // Predicated region
    $region30: #{tpu_custom_call.1} parent=1 // pred_check
      _
    $region31: #{tpu_custom_call.1} parent=1 // pred_check_branch
      %63 = sbr.rel (0) target = $region33
    $region32: #{tpu_custom_call.1} parent=1 // pred_region
      %64 = dma.done [#allocation6], 1024
    $region33: #{tpu_custom_call.1} parent=1 // pred_fallthru
      _
    %v66 = vld [vmem:[#allocation2] sm:$0xf]
    %v67 = vld [vmem:[#allocation2 + $0x4] sm:$0xf]
    %v68 = vld [vmem:[#allocation5] sm:$0xf]
    %v69 = vld [vmem:[#allocation5 + $0x4] sm:$0xf]
    %v70 = vld [vmem:[#allocation5 + $0x8] sm:$0xf]
    %v71 = vld [vmem:[#allocation5 + $0xc] sm:$0xf]
    %v72 = vld [vmem:[#allocation5 + $0x10] sm:$0xf]
    %v73 = vld [vmem:[#allocation5 + $0x14] sm:$0xf]
    %v74 = vld [vmem:[#allocation5 + $0x18] sm:$0xf]
    %v75 = vld [vmem:[#allocation5 + $0x1c] sm:$0xf]
    %v76 = vld [vmem:[#allocation5 + $0x20] sm:$0xf]
    %v77 = vld [vmem:[#allocation5 + $0x24] sm:$0xf]
    %v78 = vld [vmem:[#allocation5 + $0x28] sm:$0xf]
    %v79 = vld [vmem:[#allocation5 + $0x2c] sm:$0xf]
    %v80 = vld [vmem:[#allocation5 + $0x30] sm:$0xf]
    %v81 = vld [vmem:[#allocation5 + $0x34] sm:$0xf]
    %v82 = vld [vmem:[#allocation5 + $0x38] sm:$0xf]
    %v83 = vld [vmem:[#allocation5 + $0x3c] sm:$0xf]
    %v84 = vld [vmem:[%s2] sm:$0x1]
    %v86 = vlaneseq
    %v87 = vshrl.u32 %v86, 7
    %v88 = vsub.s32 0, %v87
    %v89 = vrot.slane %v84, %v88
    %v93 = vunpack.c.l.b16 %v66
    %v94 = vunpack.c.l.b16 %v67
    %v95 = vpack.c.b16 %v94, %v93
    %v113 = vunpack.c.l.b16 %v68
    %v114 = vunpack.c.l.b16 %v69
    %v115 = vunpack.c.l.b16 %v70
    %v116 = vunpack.c.l.b16 %v71
    %v117 = vunpack.c.l.b16 %v72
    %v118 = vunpack.c.l.b16 %v73
    %v119 = vunpack.c.l.b16 %v74
    %v120 = vunpack.c.l.b16 %v75
    %v121 = vunpack.c.l.b16 %v76
    %v122 = vunpack.c.l.b16 %v77
    %v123 = vunpack.c.l.b16 %v78
    %v124 = vunpack.c.l.b16 %v79
    %v125 = vunpack.c.l.b16 %v80
    %v126 = vunpack.c.l.b16 %v81
    %v127 = vunpack.c.l.b16 %v82
    %v128 = vunpack.c.l.b16 %v83
    %v129 = vpack.c.b16 %v114, %v113
    %v130 = vpack.c.b16 %v116, %v115
    %v131 = vpack.c.b16 %v118, %v117
    %v132 = vpack.c.b16 %v120, %v119
    %v133 = vpack.c.b16 %v122, %v121
    %v134 = vpack.c.b16 %v124, %v123
    %v135 = vpack.c.b16 %v126, %v125
    %v136 = vpack.c.b16 %v128, %v127
    %145 = vmatprep.subr.bf16.mxu0 0
    %146 = vmatpush1.bf16.msra.mxu0 %v129
    %147 = vmatprep.subr.bf16.mxu0 0
    %148 = vmatpush1.bf16.msra.mxu0 %v130
    %149 = vmatprep.subr.bf16.mxu0 0
    %150 = vmatpush1.bf16.msra.mxu0 %v131
    %151 = vmatprep.subr.bf16.mxu0 0
    %152 = vmatpush1.bf16.msra.mxu0 %v132
    %153 = vmatprep.subr.bf16.mxu0 0
    %154 = vmatpush1.bf16.msra.mxu0 %v133
    %155 = vmatprep.subr.bf16.mxu0 0
    %156 = vmatpush1.bf16.msra.mxu0 %v134
    %157 = vmatprep.subr.bf16.mxu0 0
    %158 = vmatpush1.bf16.msra.mxu0 %v135
    %159 = vmatprep.subr.bf16.mxu0 0
    %160 = vmatpush1.bf16.msra.mxu0 %v136
    %161 = vmatprep.subr.bf16.mxu0 0
    %162 = vmatpush1.bf16.msra.mxu0 0
    %163 = vmatprep.subr.bf16.mxu0 0
    %164 = vmatpush1.bf16.msra.mxu0 0
    %165 = vmatprep.subr.bf16.mxu0 0
    %166 = vmatpush1.bf16.msra.mxu0 0
    %167 = vmatprep.subr.bf16.mxu0 0
    %168 = vmatpush1.bf16.msra.mxu0 0
    %169 = vmatprep.subr.bf16.mxu0 0
    %170 = vmatpush1.bf16.msra.mxu0 0
    %171 = vmatprep.subr.bf16.mxu0 0
    %172 = vmatpush1.bf16.msra.mxu0 0
    %173 = vmatprep.subr.bf16.mxu0 0
    %174 = vmatpush1.bf16.msra.mxu0 0
    %175 = vmatprep.subr.bf16.mxu0 0
    %176 = vmatpush1.bf16.msra.mxu0 0
    %177 = vmatprep.mubr.bf16.mxu0 0
    %178 = vmatmul.mubr.bf16.gmra.mrb[0].mxu0 %v95
    %v179 = vpop.f32.mrb[0].mxu0
    %v180 = vadd.f32 %v89, %v179
    %v181 = vpop.f32.mrb[0].mxu0
    %v182 = vpop.f32.mrb[0].mxu0
    %v183 = vadd.f32 %v89, %v182
    %v184 = vpop.f32.mrb[0].mxu0
    %185 = vdwg.mxu0
    %v186 = vmax.f32 %v180, 0.0
    %v187 = vmax.f32 %v183, 0.0
    %v188 = vpack.c.bf16 %v187, %v186
    %v190 = vunpack.c.l.b16 %v188
    %v191 = vunpack.c.h.b16 %v188
    %v192 = vpack.c.b16 %v190, %v190
    %v193 = vpack.c.b16 %v191, %v191
    %196 = vst [vmem:[#allocation9] sm:$0xf] %v192
    %197 = vst [vmem:[#allocation9 + $0x4] sm:$0xf] %v193
    %v198 = vld [vmem:[#allocation7] sm:$0xf]
    %v199 = vld [vmem:[#allocation7 + $0x4] sm:$0xf]
    %v200 = vld [vmem:[#allocation7 + $0x8] sm:$0xf]
    %v201 = vld [vmem:[#allocation7 + $0xc] sm:$0xf]
    %v202 = vld [vmem:[#allocation7 + $0x10] sm:$0xf]
    %v203 = vld [vmem:[#allocation7 + $0x14] sm:$0xf]
    %v204 = vld [vmem:[#allocation7 + $0x18] sm:$0xf]
    %v205 = vld [vmem:[#allocation7 + $0x1c] sm:$0xf]
    %v206 = vld [vmem:[#allocation7 + $0x20] sm:$0xf]
    %v207 = vld [vmem:[#allocation7 + $0x24] sm:$0xf]
    %v208 = vld [vmem:[#allocation7 + $0x28] sm:$0xf]
    %v209 = vld [vmem:[#allocation7 + $0x2c] sm:$0xf]
    %v210 = vld [vmem:[#allocation7 + $0x30] sm:$0xf]
    %v211 = vld [vmem:[#allocation7 + $0x34] sm:$0xf]
    %v212 = vld [vmem:[#allocation7 + $0x38] sm:$0xf]
    %v213 = vld [vmem:[#allocation7 + $0x3c] sm:$0xf]
    %v214 = vld [vmem:[%s4] sm:$0x1]
    %v216 = vlaneseq
    %v217 = vshrl.u32 %v216, 7
    %v218 = vsub.s32 0, %v217
    %v219 = vrot.slane %v214, %v218
    %v237 = vunpack.c.l.b16 %v198
    %v238 = vunpack.c.l.b16 %v199
    %v239 = vunpack.c.l.b16 %v200
    %v240 = vunpack.c.l.b16 %v201
    %v241 = vunpack.c.l.b16 %v202
    %v242 = vunpack.c.l.b16 %v203
    %v243 = vunpack.c.l.b16 %v204
    %v244 = vunpack.c.l.b16 %v205
    %v245 = vunpack.c.l.b16 %v206
    %v246 = vunpack.c.l.b16 %v207
    %v247 = vunpack.c.l.b16 %v208
    %v248 = vunpack.c.l.b16 %v209
    %v249 = vunpack.c.l.b16 %v210
    %v250 = vunpack.c.l.b16 %v211
    %v251 = vunpack.c.l.b16 %v212
    %v252 = vunpack.c.l.b16 %v213
    %v253 = vpack.c.b16 %v238, %v237
    %v254 = vpack.c.b16 %v240, %v239
    %v255 = vpack.c.b16 %v242, %v241
    %v256 = vpack.c.b16 %v244, %v243
    %v257 = vpack.c.b16 %v246, %v245
    %v258 = vpack.c.b16 %v248, %v247
    %v259 = vpack.c.b16 %v250, %v249
    %v260 = vpack.c.b16 %v252, %v251
    %269 = vmatprep.subr.bf16.mxu0 0
    %270 = vmatpush1.bf16.msra.mxu0 %v253
    %271 = vmatprep.subr.bf16.mxu0 0
    %272 = vmatpush1.bf16.msra.mxu0 %v254
    %273 = vmatprep.subr.bf16.mxu0 0
    %274 = vmatpush1.bf16.msra.mxu0 %v255
    %275 = vmatprep.subr.bf16.mxu0 0
    %276 = vmatpush1.bf16.msra.mxu0 %v256
    %277 = vmatprep.subr.bf16.mxu0 0
    %278 = vmatpush1.bf16.msra.mxu0 %v257
    %279 = vmatprep.subr.bf16.mxu0 0
    %280 = vmatpush1.bf16.msra.mxu0 %v258
    %281 = vmatprep.subr.bf16.mxu0 0
    %282 = vmatpush1.bf16.msra.mxu0 %v259
    %283 = vmatprep.subr.bf16.mxu0 0
    %284 = vmatpush1.bf16.msra.mxu0 %v260
    %285 = vmatprep.subr.bf16.mxu0 0
    %286 = vmatpush1.bf16.msra.mxu0 0
    %287 = vmatprep.subr.bf16.mxu0 0
    %288 = vmatpush1.bf16.msra.mxu0 0
    %289 = vmatprep.subr.bf16.mxu0 0
    %290 = vmatpush1.bf16.msra.mxu0 0
    %291 = vmatprep.subr.bf16.mxu0 0
    %292 = vmatpush1.bf16.msra.mxu0 0
    %293 = vmatprep.subr.bf16.mxu0 0
    %294 = vmatpush1.bf16.msra.mxu0 0
    %295 = vmatprep.subr.bf16.mxu0 0
    %296 = vmatpush1.bf16.msra.mxu0 0
    %297 = vmatprep.subr.bf16.mxu0 0
    %298 = vmatpush1.bf16.msra.mxu0 0
    %299 = vmatprep.subr.bf16.mxu0 0
    %300 = vmatpush1.bf16.msra.mxu0 0
    %301 = vmatprep.mubr.bf16.mxu0 0
    %302 = vmatmul.mubr.bf16.gmra.mrb[0].mxu0 %v188
    %v303 = vpop.f32.mrb[0].mxu0
    %v304 = vadd.f32 %v219, %v303
    %v305 = vpop.f32.mrb[0].mxu0
    %v306 = vpop.f32.mrb[0].mxu0
    %v307 = vadd.f32 %v219, %v306
    %v308 = vpop.f32.mrb[0].mxu0
    %309 = vdwg.mxu0
    %v310 = vpack.c.bf16 %v307, %v304
    %v312 = vunpack.c.l.b16 %v310
    %v313 = vunpack.c.h.b16 %v310
    %v314 = vpack.c.b16 %v312, %v312
    %v315 = vpack.c.b16 %v313, %v313
    %318 = vst [vmem:[#allocation8] sm:$0xf] %v314
    %319 = vst [vmem:[#allocation8 + $0x4] sm:$0xf] %v315
    // Predicated region
    $region34: #{tpu_custom_call.1} parent=1 // pred_check
      _
    $region35: #{tpu_custom_call.1} parent=1 // pred_check_branch
      %321 = sbr.rel (0) target = $region37
    $region36: #{tpu_custom_call.1} parent=1 // pred_region
      %s323 = ssub.s32 128, 128
      %324 = vsyncadd [#allocation4], %s323
      %s325 = sshll.u32 [#allocation8], 4
      %s326 = int_to_ptr.vmem [resolvable:$true] %s325
      %331 = dma.vmem_to_hbm [thread:$0]  %s326, 128, %s5, [#allocation4], 64, 64, 4
    $region37: #{tpu_custom_call.1} parent=1 // pred_fallthru
      _
    // Predicated region
    $region38: #{tpu_custom_call.1} parent=1 // pred_check
      _
    $region39: #{tpu_custom_call.1} parent=1 // pred_check_branch
      %333 = sbr.rel (0) target = $region41
    $region40: #{tpu_custom_call.1} parent=1 // pred_region
      %s335 = ssub.s32 128, 128
      %336 = vsyncadd [#allocation10], %s335
      %s337 = sshll.u32 [#allocation9], 4
      %s338 = int_to_ptr.vmem [resolvable:$true] %s337
      %343 = dma.vmem_to_hbm [thread:$0]  %s338, 128, %s6, [#allocation10], 64, 64, 4
    $region41: #{tpu_custom_call.1} parent=1 // pred_fallthru
      _
    // Predicated region
    $region42: #{tpu_custom_call.1} parent=1 // pred_check
      _
    $region43: #{tpu_custom_call.1} parent=1 // pred_check_branch
      %345 = sbr.rel (0) target = $region45
    $region44: #{tpu_custom_call.1} parent=1 // pred_region
      %346 = dma.done [#allocation4], 128
    $region45: #{tpu_custom_call.1} parent=1 // pred_fallthru
      _
    // Predicated region
    $region46: #{tpu_custom_call.1} parent=1 // pred_check
      _
    $region47: #{tpu_custom_call.1} parent=1 // pred_check_branch
      %348 = sbr.rel (0) target = $region49
    $region48: #{tpu_custom_call.1} parent=1 // pred_region
      %349 = dma.done [#allocation10], 128
    $region49: #{tpu_custom_call.1} parent=1 // pred_fallthru
      _
    %350 = vsyncpa [#allocation3], 1
    %351 = vsyncpa [#allocation6], 1
    %352 = vsyncpa [#allocation4], 1
    %353 = vsyncpa [#allocation10], 1

</llo_original>
